<compile_context>
chip_gen: v7x
topology: tpu7x:2x2x1
jax: 0.10.0
libtpu: 0.0.40
codegen_flags: <defaults>
</compile_context>

<pallas_src>
from functools import partial

import jax
import jax.numpy as jnp
from jax import lax
from jax.experimental import pallas as pl
from jax.experimental.pallas import tpu as pltpu


def _feature_map(x):
    # elu(x) + 1 (alpha = 1): x+1 for x>0, exp(x) otherwise.
    return jnp.where(x > 0.0, x + 1.0, jnp.exp(x))


# --------------------------------------------------------------------------
# Pass A: stream the key/value sequence, accumulate KV and Ksum per head.
# --------------------------------------------------------------------------
def _kv_kernel(len_ref, k_ref, v_ref, kv_ref, ksum_ref, *, s_tile):
    """Grid (N, S_tiles); s is a resident-output reduction axis.

    len_ref : (N,)           SMEM scalar-prefetch, valid key count per batch
    k_ref   : (1, H, St, D)  keys tile (head-leading)
    v_ref   : (1, H, St, M)  values tile (head-leading)
    kv_ref  : (1, H, D, M)   f32 output accumulator: sum_s phi(K)[s]^T V[s]
    ksum_ref: (1, H, D)      f32 output accumulator: sum_s phi(K)[s]
    """
    n = pl.program_id(0)
    s = pl.program_id(1)

    @pl.when(s == 0)
    def _():
        kv_ref[...] = jnp.zeros_like(kv_ref)
        ksum_ref[...] = jnp.zeros_like(ksum_ref)

    # Key-length mask from an iota compare (also zeroes any padded boundary
    # rows, since their global index >= S >= length).
    offs = s * s_tile + lax.broadcasted_iota(jnp.int32, (s_tile, 1), 0)
    mask = offs < len_ref[n]                              # (St, 1)

    k = k_ref[0]                                          # (H, St, D)
    kf = _feature_map(k.astype(jnp.float32))              # fused feature map
    kf = jnp.where(mask[None, :, :], kf, 0.0)             # key-length mask
    kd = kf.astype(k.dtype)                               # native-dtype MXU operand

    v = v_ref[0]                                          # (H, St, M)
    v = jnp.where(mask[None, :, :], v, jnp.zeros_like(v))  # guard padded rows

    # Per-head K^T V, contraction over the streamed s axis, f32 accumulation.
    kv_ref[0] += lax.dot_general(
        kd, v, (((1,), (1,)), ((0,), (0,))),
        preferred_element_type=jnp.float32)               # (H, D, M)
    ksum_ref[0] += jnp.sum(kf, axis=1)                    # (H, D)


# --------------------------------------------------------------------------
# Pass B: query pass — one lane-dense block-diagonal matmul per query tile.
# --------------------------------------------------------------------------
def _query_kernel(q_ref, w_ref, e_ref, o_ref, *, hm, h, eps):
    """Grid (N, L_tiles); both axes parallel.

    q_ref : (1, Lt, H*D)  flattened queries tile (lane-dense contraction dim)
    w_ref : (1, H*D, C)   block-diagonal [KV | ksum] matrix, C = pad128(H*M+H)
    e_ref : (H, H*M)      0/1 matrix broadcasting per-head 1/Z across M lanes
    o_ref : (1, Lt, H*M)  lane-dense output tile
    """
    q = q_ref[0]
    Q = _feature_map(q.astype(jnp.float32)).astype(q.dtype)      # fused phi()

    # One MXU matmul gives every head's numerator AND denominator columns.
    acc = jnp.dot(Q, w_ref[0], preferred_element_type=jnp.float32)  # (Lt, C)
    num = acc[:, :hm]                                               # (Lt, H*M)
    z = acc[:, hm:hm + h] + eps                                     # (Lt, H)

    # EUP approx reciprocal + one Newton step (~f32 accuracy, VALU-light).
    zi = pl.reciprocal(z, approx=True)
    zi = zi * (2.0 - z * zi)

    # Broadcast per-head 1/Z across that head's M output lanes via a tiny
    # matmul against a 0/1 matrix (avoids in-kernel reshapes / lane gathers).
    zb = jnp.dot(zi, e_ref[...], preferred_element_type=jnp.float32)  # (Lt, H*M)

    o_ref[0] = (num * zb).astype(o_ref.dtype)


# --------------------------------------------------------------------------
# Wrapper
# --------------------------------------------------------------------------
def linear_attention(queries, keys, values, key_lengths=None, *, eps=1e-6,
                     l_tile=None, s_tile=None,
                     vmem_limit_bytes=48 * 1024 * 1024):
    """Pallas implementation of LinearAttention.forward (all-ones attn_mask).

    queries: (N, L, H, D), keys: (N, S, H, D), values: (N, S, H, M)
    key_lengths: (N,) int32 number of valid keys per batch element
                 (the PyTorch `key_lengths` LengthMask); defaults to S.
    Returns: (N, L, H, M)
    """
    # TODO(synk): arbitrary (non-all-ones) attn_mask is not supported — the
    # PyTorch module itself raises in that case; only key_lengths masking is
    # implemented.
    N, L, H, D = queries.shape
    _, S, _, M = values.shape
    HD, HM = H * D, H * M

    if key_lengths is None:
        key_lengths = jnp.full((N,), S, dtype=jnp.int32)
    key_lengths = key_lengths.astype(jnp.int32)

    # Tile sizes — sweep per generation; defaults sized for v7x's 64 MiB VMEM.
    if s_tile is None:
        s_tile = S if S <= 512 else 512
    if l_tile is None:
        l_tile = L if L <= 256 else 256

    # Head-leading layout so the contraction / output live on the minor dims.
    k_t = jnp.transpose(keys, (0, 2, 1, 3))     # (N, H, S, D)
    v_t = jnp.transpose(values, (0, 2, 1, 3))   # (N, H, S, M)

    # ---- Pass A: KV / Ksum accumulation, streaming S ----------------------
    kv, ksum = pl.pallas_call(
        partial(_kv_kernel, s_tile=s_tile),
        out_shape=(jax.ShapeDtypeStruct((N, H, D, M), jnp.float32),
                   jax.ShapeDtypeStruct((N, H, D), jnp.float32)),
        grid_spec=pltpu.PrefetchScalarGridSpec(
            num_scalar_prefetch=1,
            grid=(N, pl.cdiv(S, s_tile)),
            in_specs=[
                pl.BlockSpec((1, H, s_tile, D), lambda n, s, lens: (n, 0, s, 0)),
                pl.BlockSpec((1, H, s_tile, M), lambda n, s, lens: (n, 0, s, 0)),
            ],
            out_specs=[
                pl.BlockSpec((1, H, D, M), lambda n, s, lens: (n, 0, 0, 0)),
                pl.BlockSpec((1, H, D), lambda n, s, lens: (n, 0, 0)),
            ],
        ),
        compiler_params=pltpu.CompilerParams(
            dimension_semantics=("parallel", "arbitrary"),
            vmem_limit_bytes=vmem_limit_bytes),
    )(key_lengths, k_t, v_t)

    # ---- Assemble block-diagonal [KV | ksum] (tiny, plain XLA) -------------
    # W[n, h*D+d, g*M+m] = KV[n,h,d,m] if h==g else 0
    # W[n, h*D+d, H*M+g] = Ksum[n,h,d] if h==g else 0
    # TODO(synk): on v5e's 128-wide MXU a per-head (batched dot_general)
    # query pass avoids the H-fold redundant flops; block-diag fold targets
    # the 256-wide v6e/v7x MXU.
    eye = jnp.eye(H, dtype=jnp.float32)
    w_num = jnp.einsum('nhdm,hg->nhdgm', kv, eye).reshape(N, HD, HM)
    w_den = jnp.einsum('nhd,hg->nhdg', ksum, eye).reshape(N, HD, H)
    w = jnp.concatenate([w_num, w_den], axis=-1)          # (N, HD, HM + H)
    pad = (-(HM + H)) % 128                               # lane-dense MXU output
    if pad:
        w = jnp.pad(w, ((0, 0), (0, 0), (0, pad)))
    w = w.astype(queries.dtype)                           # native-dtype MXU operand
    cols = HM + H + pad

    # 0/1 matrix broadcasting per-head 1/Z across that head's M output lanes.
    expand = jnp.repeat(jnp.eye(H, dtype=jnp.float32), M, axis=1)  # (H, HM)

    q_flat = queries.reshape(N, L, HD)                    # free (contiguous) reshape

    # ---- Pass B: query pass, lane-dense output -----------------------------
    out = pl.pallas_call(
        partial(_query_kernel, hm=HM, h=H, eps=eps),
        out_shape=jax.ShapeDtypeStruct((N, L, HM), queries.dtype),
        grid_spec=pltpu.PrefetchScalarGridSpec(
            num_scalar_prefetch=0,
            grid=(N, pl.cdiv(L, l_tile)),
            in_specs=[
                pl.BlockSpec((1, l_tile, HD), lambda n, l: (n, l, 0)),
                pl.BlockSpec((1, HD, cols), lambda n, l: (n, 0, 0)),
                pl.BlockSpec((H, HM), lambda n, l: (0, 0)),
            ],
            out_specs=pl.BlockSpec((1, l_tile, HM), lambda n, l: (n, l, 0)),
        ),
        compiler_params=pltpu.CompilerParams(
            dimension_semantics=("parallel", "parallel"),
            vmem_limit_bytes=vmem_limit_bytes),
    )(q_flat, w, expand)

    return out.reshape(N, L, H, M)


# --------------------------------------------------------------------------
# Pure-JAX reference (mirrors the PyTorch forward)
# --------------------------------------------------------------------------
def linear_attention_reference(queries, keys, values, key_lengths, eps=1e-6):
    N, S = keys.shape[0], keys.shape[1]
    mask = (jnp.arange(S)[None, :] < key_lengths[:, None]).astype(jnp.float32)
    Q = _feature_map(queries.astype(jnp.float32))
    K = _feature_map(keys.astype(jnp.float32)) * mask[:, :, None, None]
    V = values.astype(jnp.float32)
    KV = jnp.einsum('nshd,nshm->nhmd', K, V)
    Z = 1.0 / (jnp.einsum('nlhd,nhd->nlh', Q, K.sum(axis=1)) + eps)
    out = jnp.einsum('nlhd,nhmd,nlh->nlhm', Q, KV, Z)
    return out.astype(queries.dtype)


if __name__ == "__main__":
    key = jax.random.PRNGKey(0)
    kq, kk, kv = jax.random.split(key, 3)

    # batch=2, seq(L)=8, key_seq(S)=8, heads=4, query_dims(D)=32, value_dims(M)=32
    N, L, S, H, D, M = 2, 8, 8, 4, 32, 32
    queries = jax.random.normal(kq, (N, L, H, D), dtype=jnp.float32)
    keys = jax.random.normal(kk, (N, S, H, D), dtype=jnp.float32)
    values = jax.random.normal(kv, (N, S, H, M), dtype=jnp.float32)

    # key_lengths: batch 0 has 8 valid keys, batch 1 has 6.
    key_lengths = jnp.array([8, 6], dtype=jnp.int32)

    y = linear_attention(queries, keys, values, key_lengths)
    y = jax.block_until_ready(y)

    y_ref = linear_attention_reference(queries, keys, values, key_lengths)
    assert y.shape == (N, L, H, M) and y.dtype == queries.dtype
    assert jnp.allclose(y, y_ref, atol=1e-3, rtol=1e-3), "mismatch vs reference"

    print("KERNEL_OK")
</pallas_src>

<mosaic_0001>
module attributes {stable_mosaic.version = 11 : i64} {
  func.func @_kv_kernel(%arg0: i32, %arg1: i32, %arg2: memref<2xi32, #tpu.memory_space<smem>>, %arg3: memref<1x4x8x32xf32, #tpu.memory_space<vmem>>, %arg4: memref<1x4x8x32xf32, #tpu.memory_space<vmem>>, %arg5: memref<1x4x32x32xf32, #tpu.memory_space<vmem>>, %arg6: memref<1x4x32xf32, #tpu.memory_space<vmem>>) attributes {dimension_semantics = [#tpu.dimension_semantics<parallel>, #tpu.dimension_semantics<arbitrary>], iteration_bounds = array<i64: 2, 1>, scalar_prefetch = 1 : i64, scratch_operands = 0 : i64, tpu.core_type = #tpu.core_type<tc>, window_params = [{transform_indices = @transform_0, window_bounds = array<i64: 1, 4, 8, 32>}, {transform_indices = @transform_1, window_bounds = array<i64: 1, 4, 8, 32>}, {transform_indices = @transform_2, window_bounds = array<i64: 1, 4, 32, 32>}, {transform_indices = @transform_3, window_bounds = array<i64: 1, 4, 32>}]} {
    %c0_i32 = arith.constant 0 : i32
    %0 = arith.cmpi eq, %arg1, %c0_i32 : i32
    %1 = arith.extui %0 : i1 to i32
    %c0_i32_0 = arith.constant 0 : i32
    %2 = arith.cmpi ne, %1, %c0_i32_0 : i32
    scf.if %2 {
      %cst_27 = arith.constant 0.000000e+00 : f32
      %45 = vector.broadcast %cst_27 : f32 to vector<1x4x32x32xf32>
      %c0_28 = arith.constant 0 : index
      %c0_29 = arith.constant 0 : index
      %c0_30 = arith.constant 0 : index
      %c0_31 = arith.constant 0 : index
      %46 = vector.load %arg5[%c0_28, %c0_29, %c0_30, %c0_31] : memref<1x4x32x32xf32, #tpu.memory_space<vmem>>, vector<1x4x32x32xf32>
      tpu.vector_store %arg5[%c0_28, %c0_29, %c0_30, %c0_31], %45 {strides = array<i32>} : memref<1x4x32x32xf32, #tpu.memory_space<vmem>>, vector<1x4x32x32xf32>,
      %cst_32 = arith.constant 0.000000e+00 : f32
      %47 = vector.broadcast %cst_32 : f32 to vector<1x4x32xf32>
      %c0_33 = arith.constant 0 : index
      %c0_34 = arith.constant 0 : index
      %c0_35 = arith.constant 0 : index
      %48 = vector.load %arg6[%c0_33, %c0_34, %c0_35] : memref<1x4x32xf32, #tpu.memory_space<vmem>>, vector<1x4x32xf32>
      tpu.vector_store %arg6[%c0_33, %c0_34, %c0_35], %47 {strides = array<i32>} : memref<1x4x32xf32, #tpu.memory_space<vmem>>, vector<1x4x32xf32>,
    } else {
    }
    %c8_i32 = arith.constant 8 : i32
    %3 = arith.muli %arg1, %c8_i32 : i32
    %4 = tpu.iota {dimensions = array<i32: 0>} : vector<8x1xi32>
    %5 = vector.broadcast %3 : i32 to vector<8x1xi32>
    %6 = arith.addi %5, %4 : vector<8x1xi32>
    %7 = arith.index_cast %arg0 : i32 to index
    %8 = memref.load %arg2[%7] : memref<2xi32, #tpu.memory_space<smem>>
    %9 = vector.broadcast %8 : i32 to vector<8x1xi32>
    %10 = arith.cmpi slt, %6, %9 : vector<8x1xi32>
    %c0 = arith.constant 0 : index
    %c0_1 = arith.constant 0 : index
    %c0_2 = arith.constant 0 : index
    %c0_3 = arith.constant 0 : index
    %11 = vector.load %arg3[%c0, %c0_1, %c0_2, %c0_3] : memref<1x4x8x32xf32, #tpu.memory_space<vmem>>, vector<1x4x8x32xf32>
    %12 = vector.shape_cast %11 : vector<1x4x8x32xf32> to vector<4x8x32xf32>
    %cst = arith.constant 0.000000e+00 : f32
    %13 = vector.broadcast %cst : f32 to vector<4x8x32xf32>
    %14 = arith.cmpf ogt, %12, %13 : vector<4x8x32xf32>
    %cst_4 = arith.constant 1.000000e+00 : f32
    %15 = vector.broadcast %cst_4 : f32 to vector<4x8x32xf32>
    %16 = arith.addf %12, %15 : vector<4x8x32xf32>
    %17 = math.exp %12 : vector<4x8x32xf32>
    %18 = arith.select %14, %16, %17 : vector<4x8x32xi1>, vector<4x8x32xf32>
    %19 = vector.shape_cast %10 : vector<8x1xi1> to vector<1x8x1xi1>
    %cst_5 = arith.constant 0.000000e+00 : f32
    %20 = vector.shape_cast %19 : vector<1x8x1xi1> to vector<1x8x1xi1>
    %21 = vector.broadcast %20 : vector<1x8x1xi1> to vector<4x8x32xi1>
    %22 = vector.broadcast %cst_5 : f32 to vector<4x8x32xf32>
    %23 = arith.select %21, %18, %22 : vector<4x8x32xi1>, vector<4x8x32xf32>
    %c0_6 = arith.constant 0 : index
    %c0_7 = arith.constant 0 : index
    %c0_8 = arith.constant 0 : index
    %c0_9 = arith.constant 0 : index
    %24 = vector.load %arg4[%c0_6, %c0_7, %c0_8, %c0_9] : memref<1x4x8x32xf32, #tpu.memory_space<vmem>>, vector<1x4x8x32xf32>
    %25 = vector.shape_cast %24 : vector<1x4x8x32xf32> to vector<4x8x32xf32>
    %26 = vector.shape_cast %10 : vector<8x1xi1> to vector<1x8x1xi1>
    %cst_10 = arith.constant 0.000000e+00 : f32
    %27 = vector.broadcast %cst_10 : f32 to vector<4x8x32xf32>
    %28 = vector.shape_cast %26 : vector<1x8x1xi1> to vector<1x8x1xi1>
    %29 = vector.broadcast %28 : vector<1x8x1xi1> to vector<4x8x32xi1>
    %30 = arith.select %29, %25, %27 : vector<4x8x32xi1>, vector<4x8x32xf32>
    %c0_11 = arith.constant 0 : index
    %c0_12 = arith.constant 0 : index
    %c0_13 = arith.constant 0 : index
    %c0_14 = arith.constant 0 : index
    %31 = vector.load %arg5[%c0_11, %c0_12, %c0_13, %c0_14] : memref<1x4x32x32xf32, #tpu.memory_space<vmem>>, vector<1x4x32x32xf32>
    %32 = vector.shape_cast %31 : vector<1x4x32x32xf32> to vector<4x32x32xf32>
    %cst_15 = arith.constant dense<0.000000e+00> : vector<4x32x32xf32>
    %33 = tpu.matmul %23, %30, %cst_15 {dimension_numbers = #tpu.dot_dimension_numbers<[1], [1], [2], [2], [0, 0, 0, 2, 1, 2], [0], [0]>} : vector<4x8x32xf32>, vector<4x8x32xf32>, vector<4x32x32xf32> -> vector<4x32x32xf32>
    %34 = arith.addf %32, %33 : vector<4x32x32xf32>
    %c0_16 = arith.constant 0 : index
    %c0_17 = arith.constant 0 : index
    %c0_18 = arith.constant 0 : index
    %c0_19 = arith.constant 0 : index
    %35 = vector.load %arg5[%c0_16, %c0_17, %c0_18, %c0_19] : memref<1x4x32x32xf32, #tpu.memory_space<vmem>>, vector<1x4x32x32xf32>
    %36 = vector.shape_cast %35 : vector<1x4x32x32xf32> to vector<4x32x32xf32>
    %37 = vector.shape_cast %34 : vector<4x32x32xf32> to vector<1x4x32x32xf32>
    tpu.vector_store %arg5[%c0_16, %c0_17, %c0_18, %c0_19], %37 {strides = array<i32>} : memref<1x4x32x32xf32, #tpu.memory_space<vmem>>, vector<1x4x32x32xf32>,
    %c0_20 = arith.constant 0 : index
    %c0_21 = arith.constant 0 : index
    %c0_22 = arith.constant 0 : index
    %38 = vector.load %arg6[%c0_20, %c0_21, %c0_22] : memref<1x4x32xf32, #tpu.memory_space<vmem>>, vector<1x4x32xf32>
    %39 = vector.shape_cast %38 : vector<1x4x32xf32> to vector<4x32xf32>
    %cst_23 = arith.constant dense<0.000000e+00> : vector<4x32xf32>
    %40 = vector.multi_reduction <add>, %23, %cst_23 [1] : vector<4x8x32xf32> to vector<4x32xf32>
    %41 = arith.addf %39, %40 : vector<4x32xf32>
    %c0_24 = arith.constant 0 : index
    %c0_25 = arith.constant 0 : index
    %c0_26 = arith.constant 0 : index
    %42 = vector.load %arg6[%c0_24, %c0_25, %c0_26] : memref<1x4x32xf32, #tpu.memory_space<vmem>>, vector<1x4x32xf32>
    %43 = vector.shape_cast %42 : vector<1x4x32xf32> to vector<4x32xf32>
    %44 = vector.shape_cast %41 : vector<4x32xf32> to vector<1x4x32xf32>
    tpu.vector_store %arg6[%c0_24, %c0_25, %c0_26], %44 {strides = array<i32>} : memref<1x4x32xf32, #tpu.memory_space<vmem>>, vector<1x4x32xf32>,
    return
  }
  func.func @transform_0(%arg0: i32, %arg1: i32, %arg2: memref<2xi32, #tpu.memory_space<smem>>) -> (i32, i32, i32, i32) {
    %c0_i32 = arith.constant 0 : i32
    %c0_i32_0 = arith.constant 0 : i32
    %c0_i32_1 = arith.constant 0 : i32
    return %arg0, %c0_i32, %arg1, %c0_i32_0 : i32, i32, i32, i32
  }
  func.func @transform_1(%arg0: i32, %arg1: i32, %arg2: memref<2xi32, #tpu.memory_space<smem>>) -> (i32, i32, i32, i32) {
    %c0_i32 = arith.constant 0 : i32
    %c0_i32_0 = arith.constant 0 : i32
    %c0_i32_1 = arith.constant 0 : i32
    return %arg0, %c0_i32, %arg1, %c0_i32_0 : i32, i32, i32, i32
  }
  func.func @transform_2(%arg0: i32, %arg1: i32, %arg2: memref<2xi32, #tpu.memory_space<smem>>) -> (i32, i32, i32, i32) {
    %c0_i32 = arith.constant 0 : i32
    %c0_i32_0 = arith.constant 0 : i32
    %c0_i32_1 = arith.constant 0 : i32
    %c0_i32_2 = arith.constant 0 : i32
    return %arg0, %c0_i32, %c0_i32_0, %c0_i32_1 : i32, i32, i32, i32
  }
  func.func @transform_3(%arg0: i32, %arg1: i32, %arg2: memref<2xi32, #tpu.memory_space<smem>>) -> (i32, i32, i32) {
    %c0_i32 = arith.constant 0 : i32
    %c0_i32_0 = arith.constant 0 : i32
    %c0_i32_1 = arith.constant 0 : i32
    return %arg0, %c0_i32, %c0_i32_0 : i32, i32, i32
  }
}

</mosaic_0001>

<llo_original>
// kernel: tpu_custom_call.1
$region0: #{tpu_custom_call.1}
  #allocation0 [shape = 'u32[]', space=smem, size = 0x4, offset = 0x4, fixed_abs, tag = 'smem constant byte address 0x4 - core index']
  #allocation1 [shape = 'u32[144,128]{1,0:T(1,128)}', space=vmem, size = 0x12000, scoped, tag = 'internal scratch']
  #allocation2 [shape = 's32[1]{0}', space=sflag, size = 0x4, scoped, tag = 'scoped memory for tpu_custom_call.1']
  #allocation3 [shape = 'u8[512]{0}', space=smem, size = 0x200, scoped, tag = 'prefetched SMEM operand 0']
  %s0 = inlined_call_operand.hbm [shape: s32[2], index: 0, kind: input, shape index: {}]
  %s1 = inlined_call_operand.hbm [shape: f32[2,4,8,32], index: 1, kind: input, shape index: {}]
  %s2 = inlined_call_operand.hbm [shape: f32[2,4,8,32], index: 2, kind: input, shape index: {}]
  %s3 = inlined_call_operand.hbm [shape: f32[2,4,32,32], index: 3, kind: output, shape index: {0}]
  %s4 = inlined_call_operand.hbm [shape: f32[2,4,32], index: 4, kind: output, shape index: {1}]
  %5 = xla_tuple %s3, %s4
  %s6 = sld [smem:[#allocation0]]
  $region61: #{tpu_custom_call.1} parent=0
    _
  %s8 = ssub.s32 1, %s6
  %s9 = scalar_select 0, %s8, %s6
  %11 = dma.hbm_to_smem %s0, 16, [#allocation3], [#allocation2]
  %12 = dma.done [#allocation2], 16
  %13 = sfence
  $region1: #{tpu_custom_call.1} parent=0
    #allocation4 [shape = 'u8[32768]{0}', space=vmem, size = 0x8000, scoped, tag = 'input window, operand 1']
    #allocation5 [shape = 's32[2]{0}', space=sflag, size = 0x8, scoped, tag = 'scoped memory for tpu_custom_call.1']
    #allocation6 [shape = 's32[2]{0}', space=sflag, size = 0x8, scoped, tag = 'scoped memory for tpu_custom_call.1']
    #allocation7 [shape = 'u8[32768]{0}', space=vmem, size = 0x8000, scoped, tag = 'input window, operand 2']
    #allocation8 [shape = 's32[2]{0}', space=sflag, size = 0x8, scoped, tag = 'scoped memory for tpu_custom_call.1']
    #allocation9 [shape = 'u8[131072]{0}', space=vmem, size = 0x20000, scoped, tag = 'output window, operand 0']
    #allocation10 [shape = 'u8[4096]{0}', space=vmem, size = 0x1000, scoped, tag = 'output window, operand 1']
    #allocation11 [shape = 's32[2]{0}', space=sflag, size = 0x8, scoped, tag = 'scoped memory for tpu_custom_call.1']
    %14 = vsyncpa [#allocation5], 0
    %s15 = scalar_lea.sflag [#allocation5], 1
    %16 = vsyncpa %s15, 0
    %17 = vsyncpa [#allocation8], 0
    %s18 = scalar_lea.sflag [#allocation8], 1
    %19 = vsyncpa %s18, 0
    %20 = vsyncpa [#allocation6], 0
    %s21 = scalar_lea.sflag [#allocation6], 1
    %22 = vsyncpa %s21, 0
    %23 = vsyncpa [#allocation11], 0
    %s24 = scalar_lea.sflag [#allocation11], 1
    %25 = vsyncpa %s24, 0
    loop: start=0, step=1, limit=4
    $region2: #{tpu_custom_call.1} parent=1 // loop_pre_header
      _
    $region3: #{tpu_custom_call.1} parent=1 // loop_header
      %s27 = sphi 0, %s31
      %p28 = scmp.ge.s32.totalorder %s27, 4
      %s34 = sphi 0, %s46
      %s35 = sphi 0, %s42
      %s36 = sphi 0, %s34
      %s37 = sphi 0, %s35
      %s38 = sphi 0, %s36
      %s39 = sphi 0, %s37
      %s51 = sphi 0, %s53
      %s54 = sphi 0, %s51
      %s55 = sphi 0, %s54
      %s71 = sphi 0, %s55
      %s79 = sphi 0, %s81
      %s82 = sphi 0, %s79
      %s83 = sphi 0, %s82
      %s99 = sphi 0, %s83
      %s105 = sphi 0, %s107
      %s108 = sphi 0, %s105
      %s109 = sphi 0, %s108
      %s125 = sphi 0, %s109
      %s131 = sphi 0, %s133
      %s134 = sphi 0, %s131
      %s135 = sphi 0, %s134
      %s151 = sphi 0, %s135
    $region4: #{tpu_custom_call.1} parent=1 // loop_header_branch
      %30 = sbr.rel (%p28) target = $region8
    $region5: #{tpu_custom_call.1} parent=1 // loop_body
      %s32 = ssub.s32 %s27, 1
      %s33 = ssub.s32 %s27, 2
      %s40 = sadd.s32 1, %s35
      %p41 = scmp.ge.s32.totalorder %s40, 1
      %s42 = scalar_select %p41, 0, %s40
      %s43 = sadd.s32 1, %s34
      %s44 = scalar_select %p41, %s43, %s34
      %p45 = scmp.ge.s32.totalorder %s44, 2
      %s46 = scalar_select %p45, 0, %s44
      %s47 = ssub.s32 %s34, %s46
      %s48 = ssub.s32 %s35, %s42
      %s49 = sor.u32 %s47, %s48
      %p50 = scmp.eq.s32.totalorder %s49, 0
      %s52 = sadd.s32 %s51, 1
      %s53 = scalar_select %p50, %s51, %s52
      %p56 = pneg %p50
      %p57 = scmp.eq.s32.totalorder %s27, 1
      %p58 = por %p56, %p57
      %p59 = scmp.ne.s32.totalorder %s51, %s54
      %p60 = scmp.eq.s32.totalorder %s27, 0
      %p61 = por %p59, %p60
      %p62 = scmp.ne.s32.totalorder %s51, %s54
      %p63 = scmp.eq.s32.totalorder %s32, 1
      %p64 = por %p62, %p63
      %p65 = scmp.ne.s32.totalorder %s54, %s55
      %p66 = scmp.eq.s32.totalorder %s32, 0
      %p67 = por %p65, %p66
      %p68 = scmp.ne.s32.totalorder %s54, %s55
      %p69 = scmp.eq.s32.totalorder %s33, 1
      %p70 = por %p68, %p69
      %p72 = scmp.ne.s32.totalorder %s55, %s71
      %p73 = scmp.eq.s32.totalorder %s33, 0
      %p74 = por %p72, %p73
      %s75 = ssub.s32 %s34, %s46
      %s76 = ssub.s32 %s35, %s42
      %s77 = sor.u32 %s75, %s76
      %p78 = scmp.eq.s32.totalorder %s77, 0
      %s80 = sadd.s32 %s79, 1
      %s81 = scalar_select %p78, %s79, %s80
      %p84 = pneg %p78
      %p85 = scmp.eq.s32.totalorder %s27, 1
      %p86 = por %p84, %p85
      %p87 = scmp.ne.s32.totalorder %s79, %s82
      %p88 = scmp.eq.s32.totalorder %s27, 0
      %p89 = por %p87, %p88
      %p90 = scmp.ne.s32.totalorder %s79, %s82
      %p91 = scmp.eq.s32.totalorder %s32, 1
      %p92 = por %p90, %p91
      %p93 = scmp.ne.s32.totalorder %s82, %s83
      %p94 = scmp.eq.s32.totalorder %s32, 0
      %p95 = por %p93, %p94
      %p96 = scmp.ne.s32.totalorder %s82, %s83
      %p97 = scmp.eq.s32.totalorder %s33, 1
      %p98 = por %p96, %p97
      %p100 = scmp.ne.s32.totalorder %s83, %s99
      %p101 = scmp.eq.s32.totalorder %s33, 0
      %p102 = por %p100, %p101
      %s103 = ssub.s32 %s34, %s46
      %p104 = scmp.eq.s32.totalorder %s103, 0
      %s106 = sadd.s32 %s105, 1
      %s107 = scalar_select %p104, %s105, %s106
      %p110 = pneg %p104
      %p111 = scmp.eq.s32.totalorder %s27, 1
      %p112 = por %p110, %p111
      %p113 = scmp.ne.s32.totalorder %s105, %s108
      %p114 = scmp.eq.s32.totalorder %s27, 0
      %p115 = por %p113, %p114
      %p116 = scmp.ne.s32.totalorder %s105, %s108
      %p117 = scmp.eq.s32.totalorder %s32, 1
      %p118 = por %p116, %p117
      %p119 = scmp.ne.s32.totalorder %s108, %s109
      %p120 = scmp.eq.s32.totalorder %s32, 0
      %p121 = por %p119, %p120
      %p122 = scmp.ne.s32.totalorder %s108, %s109
      %p123 = scmp.eq.s32.totalorder %s33, 1
      %p124 = por %p122, %p123
      %p126 = scmp.ne.s32.totalorder %s109, %s125
      %p127 = scmp.eq.s32.totalorder %s33, 0
      %p128 = por %p126, %p127
      %s129 = ssub.s32 %s34, %s46
      %p130 = scmp.eq.s32.totalorder %s129, 0
      %s132 = sadd.s32 %s131, 1
      %s133 = scalar_select %p130, %s131, %s132
      %p136 = pneg %p130
      %p137 = scmp.eq.s32.totalorder %s27, 1
      %p138 = por %p136, %p137
      %p139 = scmp.ne.s32.totalorder %s131, %s134
      %p140 = scmp.eq.s32.totalorder %s27, 0
      %p141 = por %p139, %p140
      %p142 = scmp.ne.s32.totalorder %s131, %s134
      %p143 = scmp.eq.s32.totalorder %s32, 1
      %p144 = por %p142, %p143
      %p145 = scmp.ne.s32.totalorder %s134, %s135
      %p146 = scmp.eq.s32.totalorder %s32, 0
      %p147 = por %p145, %p146
      %p148 = scmp.ne.s32.totalorder %s134, %s135
      %p149 = scmp.eq.s32.totalorder %s33, 1
      %p150 = por %p148, %p149
      %p152 = scmp.ne.s32.totalorder %s135, %s151
      %p153 = scmp.eq.s32.totalorder %s33, 0
      %p154 = por %p152, %p153
      %p155 = scmp.le.s32.totalorder 1, %s27
      %p156 = scmp.lt.s32.totalorder %s27, 3
      %p157 = pnand %p155, %p156
      %p158 = pneg %p157
      // Predicated region
      $region9: #{tpu_custom_call.1} parent=5 // pred_check
        _
      $region10: #{tpu_custom_call.1} parent=5 // pred_check_branch
        %160 = sbr.rel (%p157) target = $region12
      $region11: #{tpu_custom_call.1} parent=5 // pred_region
        %s161 = ssub.s32 %s27, 1
      $region12: #{tpu_custom_call.1} parent=5 // pred_fallthru
        _
      %p162 = scmp.lt.s32.totalorder %s27, 2
      // Predicated region
      $region13: #{tpu_custom_call.1} parent=5 // pred_check
        %p163 = pneg %p162
      $region14: #{tpu_custom_call.1} parent=5 // pred_check_branch
        %165 = sbr.rel (%p163) target = $region16
      $region15: #{tpu_custom_call.1} parent=5 // pred_region
        // Predicated region
        $region17: #{tpu_custom_call.1} parent=15 // pred_check
          %p166 = pneg %p61
        $region18: #{tpu_custom_call.1} parent=15 // pred_check_branch
          %168 = sbr.rel (%p166) target = $region20
        $region19: #{tpu_custom_call.1} parent=15 // pred_region
          %s169 = sand.u32 %s51, 1
          %s170 = scalar_lea.sflag [#allocation5], %s169
          %s171 = sand.u32 %s51, 1
          %s172 = smul.addr %s171, 32
          %s173 = scalar_lea.vmem [#allocation4], %s172
          %s175 = ssub.s32 512, 512
          %176 = vsyncadd %s170, %s175
          %s177 = smul.addr %s34, 4
          %s178 = sadd.s32 %s35, %s177
          %s179 = smul.addr %s178, 128
          %s180 = scalar_lea.hbm %s1, %s179
          %s181 = sshll.u32 %s173, 4
          %s182 = int_to_ptr.vmem [resolvable:$true] %s181
          %187 = dma.hbm_to_vmem [thread:$0]  %s180, 512, %s182, %s170, 128, 128, 8
        $region20: #{tpu_custom_call.1} parent=15 // pred_fallthru
          _
        // Predicated region
        $region21: #{tpu_custom_call.1} parent=15 // pred_check
          %p188 = pneg %p89
        $region22: #{tpu_custom_call.1} parent=15 // pred_check_branch
          %190 = sbr.rel (%p188) target = $region24
        $region23: #{tpu_custom_call.1} parent=15 // pred_region
          %s191 = sand.u32 %s79, 1
          %s192 = scalar_lea.sflag [#allocation8], %s191
          %s193 = sand.u32 %s79, 1
          %s194 = smul.addr %s193, 32
          %s195 = scalar_lea.vmem [#allocation7], %s194
          %s197 = ssub.s32 512, 512
          %198 = vsyncadd %s192, %s197
          %s199 = smul.addr %s34, 4
          %s200 = sadd.s32 %s35, %s199
          %s201 = smul.addr %s200, 128
          %s202 = scalar_lea.hbm %s2, %s201
          %s203 = sshll.u32 %s195, 4
          %s204 = int_to_ptr.vmem [resolvable:$true] %s203
          %209 = dma.hbm_to_vmem [thread:$0]  %s202, 512, %s204, %s192, 128, 128, 8
        $region24: #{tpu_custom_call.1} parent=15 // pred_fallthru
          _
      $region16: #{tpu_custom_call.1} parent=5 // pred_fallthru
        _
      %p210 = scmp.le.s32.totalorder 1, %s27
      %p211 = scmp.lt.s32.totalorder %s27, 3
      %p212 = pnand %p210, %p211
      %p213 = pneg %p212
      // Predicated region
      $region25: #{tpu_custom_call.1} parent=5 // pred_check
        _
      $region26: #{tpu_custom_call.1} parent=5 // pred_check_branch
        %215 = sbr.rel (%p212) target = $region28
      $region27: #{tpu_custom_call.1} parent=5 // pred_region
        %s216 = ssub.s32 %s27, 1
        %s217 = sand.u32 %s54, 1
        %s218 = scalar_lea.sflag [#allocation5], %s217
        %s219 = sand.u32 %s54, 1
        %s220 = smul.addr %s219, 32
        %s221 = scalar_lea.vmem [#allocation4], %s220
        // Predicated region
        $region29: #{tpu_custom_call.1} parent=27 // pred_check
          %p222 = pneg %p67
        $region30: #{tpu_custom_call.1} parent=27 // pred_check_branch
          %224 = sbr.rel (%p222) target = $region32
        $region31: #{tpu_custom_call.1} parent=27 // pred_region
          %225 = dma.done %s218, 512
        $region32: #{tpu_custom_call.1} parent=27 // pred_fallthru
          _
        %s226 = sand.u32 %s82, 1
        %s227 = scalar_lea.sflag [#allocation8], %s226
        %s228 = sand.u32 %s82, 1
        %s229 = smul.addr %s228, 32
        %s230 = scalar_lea.vmem [#allocation7], %s229
        // Predicated region
        $region33: #{tpu_custom_call.1} parent=27 // pred_check
          %p231 = pneg %p95
        $region34: #{tpu_custom_call.1} parent=27 // pred_check_branch
          %233 = sbr.rel (%p231) target = $region36
        $region35: #{tpu_custom_call.1} parent=27 // pred_region
          %234 = dma.done %s227, 512
        $region36: #{tpu_custom_call.1} parent=27 // pred_fallthru
          _
        %s235 = sand.u32 %s54, 1
        %s236 = scalar_lea.sflag [#allocation5], %s235
        %s237 = sand.u32 %s54, 1
        %s238 = smul.addr %s237, 32
        %s239 = scalar_lea.vmem [#allocation4], %s238
        %p240 = pneg %p67
        %p241 = pneg %p64
        %s242 = sand.u32 %s82, 1
        %s243 = scalar_lea.sflag [#allocation8], %s242
        %s244 = sand.u32 %s82, 1
        %s245 = smul.addr %s244, 32
        %s246 = scalar_lea.vmem [#allocation7], %s245
        %p247 = pneg %p95
        %p248 = pneg %p92
        %p249 = pneg %p121
        %p250 = pneg %p118
        %s251 = sand.u32 %s108, 1
        %s252 = scalar_lea.sflag [#allocation6], %s251
        %s253 = sand.u32 %s108, 1
        %s254 = smul.addr %s253, 128
        %s255 = scalar_lea.vmem [#allocation9], %s254
        %p256 = pneg %p147
        %p257 = pneg %p144
        %s258 = sand.u32 %s134, 1
        %s259 = scalar_lea.sflag [#allocation11], %s258
        %s260 = sand.u32 %s134, 1
        %s261 = smul.addr %s260, 4
        %s262 = scalar_lea.vmem [#allocation10], %s261
        %p263 = scmp.eq.s32.totalorder %s37, 0
        // Predicated region
        $region37: #{tpu_custom_call.1} parent=27 // pred_check
          %p264 = pneg %p263
        $region38: #{tpu_custom_call.1} parent=27 // pred_check_branch
          %266 = sbr.rel (%p264) target = $region40
        $region39: #{tpu_custom_call.1} parent=27 // pred_region
          %vm267 = vcmask 261120
          %268 = vst.msk [vmem:[%s255] sm:$0xff] %vm267, 0.0
          %269 = vst.msk [vmem:[%s255 + $0x8] sm:$0xff] %vm267, 0.0
          %270 = vst.msk [vmem:[%s255 + $0x10] sm:$0xff] %vm267, 0.0
          %271 = vst.msk [vmem:[%s255 + $0x18] sm:$0xff] %vm267, 0.0
          %272 = vst.msk [vmem:[%s255 + $0x20] sm:$0xff] %vm267, 0.0
          %273 = vst.msk [vmem:[%s255 + $0x28] sm:$0xff] %vm267, 0.0
          %274 = vst.msk [vmem:[%s255 + $0x30] sm:$0xff] %vm267, 0.0
          %275 = vst.msk [vmem:[%s255 + $0x38] sm:$0xff] %vm267, 0.0
          %276 = vst.msk [vmem:[%s255 + $0x40] sm:$0xff] %vm267, 0.0
          %277 = vst.msk [vmem:[%s255 + $0x48] sm:$0xff] %vm267, 0.0
          %278 = vst.msk [vmem:[%s255 + $0x50] sm:$0xff] %vm267, 0.0
          %279 = vst.msk [vmem:[%s255 + $0x58] sm:$0xff] %vm267, 0.0
          %280 = vst.msk [vmem:[%s255 + $0x60] sm:$0xff] %vm267, 0.0
          %281 = vst.msk [vmem:[%s255 + $0x68] sm:$0xff] %vm267, 0.0
          %282 = vst.msk [vmem:[%s255 + $0x70] sm:$0xff] %vm267, 0.0
          %283 = vst.msk [vmem:[%s255 + $0x78] sm:$0xff] %vm267, 0.0
          %vm284 = vcmask 257024
          %285 = vst.msk [vmem:[%s262] sm:$0xf] %vm284, 0.0
        $region40: #{tpu_custom_call.1} parent=27 // pred_fallthru
          _
        %s286 = smul.u32 %s37, 8
        %v287 = vlaneseq
        %v288 = vshrl.u32 %v287, 7
        %v289 = vstv %s286
        %v290 = vadd.s32 %v289, %v288
        %s291 = sld [smem:[#allocation3 + %s36]]
        %v292 = vstv %s291
        %vm293 = vcmp.lt.s32.totalorder %v290, %v292
        %v294 = vld [vmem:[%s221] sm:$0xff]
        %v295 = vld [vmem:[%s221 + $0x8] sm:$0xff]
        %v296 = vld [vmem:[%s221 + $0x10] sm:$0xff]
        %v297 = vld [vmem:[%s221 + $0x18] sm:$0xff]
        %vm298 = vcmp.gt.f32.partialorder %v294, 0.0
        %vm299 = vcmp.gt.f32.partialorder %v295, 0.0
        %vm300 = vcmp.gt.f32.partialorder %v296, 0.0
        %vm301 = vcmp.gt.f32.partialorder %v297, 0.0
        %v302 = vadd.f32 %v294, 1.0
        %v303 = vadd.f32 %v295, 1.0
        %v304 = vadd.f32 %v296, 1.0
        %v305 = vadd.f32 %v297, 1.0
        %v306 = vmul.f32 %v294, 1.442695
        %v307 = vpow.pop %v306
        %v308 = vmul.f32 %v295, 1.442695
        %v309 = vpow.pop %v308
        %v310 = vmul.f32 %v296, 1.442695
        %v311 = vpow.pop %v310
        %v312 = vmul.f32 %v297, 1.442695
        %v313 = vpow.pop %v312
        %v314 = vsel %vm298, %v302, %v307
        %v315 = vsel %vm299, %v303, %v309
        %v316 = vsel %vm300, %v304, %v311
        %v317 = vsel %vm301, %v305, %v313
        %v318 = vsel %vm293, 1, 0
        %vm319 = vcmp.eq.s32.totalorder %v318, 1
        %v320 = vsel %vm319, %v314, 0.0
        %v321 = vsel %vm319, %v315, 0.0
        %v322 = vsel %vm319, %v316, 0.0
        %v323 = vsel %vm319, %v317, 0.0
        %v324 = vld [vmem:[%s230] sm:$0xff]
        %v325 = vld [vmem:[%s230 + $0x8] sm:$0xff]
        %v326 = vld [vmem:[%s230 + $0x10] sm:$0xff]
        %v327 = vld [vmem:[%s230 + $0x18] sm:$0xff]
        %v328 = vsel %vm319, %v324, 0.0
        %v329 = vsel %vm319, %v325, 0.0
        %v330 = vsel %vm319, %v326, 0.0
        %v331 = vsel %vm319, %v327, 0.0
        %v332 = vld [vmem:[%s255] sm:$0xff]
        %v333 = vld [vmem:[%s255 + $0x8] sm:$0xff]
        %v334 = vld [vmem:[%s255 + $0x10] sm:$0xff]
        %v335 = vld [vmem:[%s255 + $0x18] sm:$0xff]
        %v336 = vld [vmem:[%s255 + $0x20] sm:$0xff]
        %v337 = vld [vmem:[%s255 + $0x28] sm:$0xff]
        %v338 = vld [vmem:[%s255 + $0x30] sm:$0xff]
        %v339 = vld [vmem:[%s255 + $0x38] sm:$0xff]
        %v340 = vld [vmem:[%s255 + $0x40] sm:$0xff]
        %v341 = vld [vmem:[%s255 + $0x48] sm:$0xff]
        %v342 = vld [vmem:[%s255 + $0x50] sm:$0xff]
        %v343 = vld [vmem:[%s255 + $0x58] sm:$0xff]
        %v344 = vld [vmem:[%s255 + $0x60] sm:$0xff]
        %v345 = vld [vmem:[%s255 + $0x68] sm:$0xff]
        %v346 = vld [vmem:[%s255 + $0x70] sm:$0xff]
        %v347 = vld [vmem:[%s255 + $0x78] sm:$0xff]
        %348 = vxpose.xlu0.b32.start [1/16] %v320, 128
        %349 = vxpose.xlu0.b32.cont [2/16] 0.0, 128
        %350 = vxpose.xlu0.b32.cont [3/16] 0.0, 128
        %351 = vxpose.xlu0.b32.cont [4/16] 0.0, 128
        %352 = vxpose.xlu0.b32.cont [5/16] 0.0, 128
        %353 = vxpose.xlu0.b32.cont [6/16] 0.0, 128
        %354 = vxpose.xlu0.b32.cont [7/16] 0.0, 128
        %355 = vxpose.xlu0.b32.cont [8/16] 0.0, 128
        %356 = vxpose.xlu0.b32.cont [9/16] 0.0, 128
        %357 = vxpose.xlu0.b32.cont [10/16] 0.0, 128
        %358 = vxpose.xlu0.b32.cont [11/16] 0.0, 128
        %359 = vxpose.xlu0.b32.cont [12/16] 0.0, 128
        %360 = vxpose.xlu0.b32.cont [13/16] 0.0, 128
        %361 = vxpose.xlu0.b32.cont [14/16] 0.0, 128
        %362 = vxpose.xlu0.b32.cont [15/16] 0.0, 128
        %363 = vxpose.xlu0.b32.end [16/16] 0.0, 128
        %v364 = vpop.trf.xlu0
        %v365 = vpop.trf.xlu0
        %v366 = vpop.trf.xlu0
        %v367 = vpop.trf.xlu0
        %v368 = vpop.trf.xlu0
        %v369 = vpop.trf.xlu0
        %v370 = vpop.trf.xlu0
        %v371 = vpop.trf.xlu0
        %v372 = vpop.trf.xlu0
        %v373 = vpop.trf.xlu0
        %v374 = vpop.trf.xlu0
        %v375 = vpop.trf.xlu0
        %v376 = vpop.trf.xlu0
        %v377 = vpop.trf.xlu0
        %v378 = vpop.trf.xlu0
        %v379 = vpop.trf.xlu0
        %vm380 = vcmask 64512
        %v382 = vsel %vm380, %v364, 0
        %v385 = vsel %vm380, %v365, 0
        %v388 = vsel %vm380, %v366, 0
        %v391 = vsel %vm380, %v367, 0
        %393 = vmatprep.subr.mxu0 0.0
        %394 = vmatpush1.msra.mxu0 %v328
        %395 = vmatprep.subr.mxu0 0.0
        %396 = vmatpush1.msra.mxu0 0.0
        %397 = vmatprep.subr.mxu0 0.0
        %398 = vmatpush1.msra.mxu0 0.0
        %399 = vmatprep.subr.mxu0 0.0
        %400 = vmatpush1.msra.mxu0 0.0
        %401 = vmatprep.subr.mxu0 0.0
        %402 = vmatpush1.msra.mxu0 0.0
        %403 = vmatprep.subr.mxu0 0.0
        %404 = vmatpush1.msra.mxu0 0.0
        %405 = vmatprep.subr.mxu0 0.0
        %406 = vmatpush1.msra.mxu0 0.0
        %407 = vmatprep.subr.mxu0 0.0
        %408 = vmatpush1.msra.mxu0 0.0
        %409 = vmatprep.subr.mxu0 0.0
        %410 = vmatpush1.msra.mxu0 0.0
        %411 = vmatprep.subr.mxu0 0.0
        %412 = vmatpush1.msra.mxu0 0.0
        %413 = vmatprep.subr.mxu0 0.0
        %414 = vmatpush1.msra.mxu0 0.0
        %415 = vmatprep.subr.mxu0 0.0
        %416 = vmatpush1.msra.mxu0 0.0
        %417 = vmatprep.subr.mxu0 0.0
        %418 = vmatpush1.msra.mxu0 0.0
        %419 = vmatprep.subr.mxu0 0.0
        %420 = vmatpush1.msra.mxu0 0.0
        %421 = vmatprep.subr.mxu0 0.0
        %422 = vmatpush1.msra.mxu0 0.0
        %423 = vmatprep.subr.mxu0 0.0
        %424 = vmatpush1.msra.mxu0 0.0
        %425 = vmatprep.subr.mxu0 0.0
        %426 = vmatpush1.msra.mxu0 0.0
        %427 = vmatprep.subr.mxu0 0.0
        %428 = vmatpush1.msra.mxu0 0.0
        %429 = vmatprep.subr.mxu0 0.0
        %430 = vmatpush1.msra.mxu0 0.0
        %431 = vmatprep.subr.mxu0 0.0
        %432 = vmatpush1.msra.mxu0 0.0
        %433 = vmatprep.subr.mxu0 0.0
        %434 = vmatpush1.msra.mxu0 0.0
        %435 = vmatprep.subr.mxu0 0.0
        %436 = vmatpush1.msra.mxu0 0.0
        %437 = vmatprep.subr.mxu0 0.0
        %438 = vmatpush1.msra.mxu0 0.0
        %439 = vmatprep.subr.mxu0 0.0
        %440 = vmatpush1.msra.mxu0 0.0
        %441 = vmatprep.subr.mxu0 0.0
        %442 = vmatpush1.msra.mxu0 0.0
        %443 = vmatprep.subr.mxu0 0.0
        %444 = vmatpush1.msra.mxu0 0.0
        %445 = vmatprep.subr.mxu0 0.0
        %446 = vmatpush1.msra.mxu0 0.0
        %447 = vmatprep.subr.mxu0 0.0
        %448 = vmatpush1.msra.mxu0 0.0
        %449 = vmatprep.subr.mxu0 0.0
        %450 = vmatpush1.msra.mxu0 0.0
        %451 = vmatprep.subr.mxu0 0.0
        %452 = vmatpush1.msra.mxu0 0.0
        %453 = vmatprep.subr.mxu0 0.0
        %454 = vmatpush1.msra.mxu0 0.0
        %455 = vmatprep.subr.mxu0 0.0
        %456 = vmatpush1.msra.mxu0 0.0
        %457 = vmatprep.mubr.f32.mxu0 0.0
        %458 = vmatmul.mubr.f32.gmra.mrb[0].mxu0 %v382
        %v459 = vpop.f32.mrb[0].mxu0
        %v460 = vadd.f32 0.0, %v459
        %v461 = vpop.f32.mrb[0].mxu0
        %462 = vmatprep.mubr.f32.mxu0 0.0
        %463 = vmatmul.mubr.f32.gmra.mrb[0].mxu0 %v385
        %v464 = vpop.f32.mrb[0].mxu0
        %v465 = vadd.f32 0.0, %v464
        %v466 = vpop.f32.mrb[0].mxu0
        %467 = vmatprep.mubr.f32.mxu0 0.0
        %468 = vmatmul.mubr.f32.gmra.mrb[0].mxu0 %v388
        %v469 = vpop.f32.mrb[0].mxu0
        %v470 = vadd.f32 0.0, %v469
        %v471 = vpop.f32.mrb[0].mxu0
        %472 = vmatprep.mubr.f32.mxu0 0.0
        %473 = vmatmul.mubr.f32.gmra.mrb[0].mxu0 %v391
        %v474 = vpop.f32.mrb[0].mxu0
        %v475 = vadd.f32 0.0, %v474
        %v476 = vpop.f32.mrb[0].mxu0
        %477 = vdwg.mxu0
        %478 = vxpose.xlu0.b32.start [1/16] %v321, 128
        %479 = vxpose.xlu0.b32.cont [2/16] 0.0, 128
        %480 = vxpose.xlu0.b32.cont [3/16] 0.0, 128
        %481 = vxpose.xlu0.b32.cont [4/16] 0.0, 128
        %482 = vxpose.xlu0.b32.cont [5/16] 0.0, 128
        %483 = vxpose.xlu0.b32.cont [6/16] 0.0, 128
        %484 = vxpose.xlu0.b32.cont [7/16] 0.0, 128
        %485 = vxpose.xlu0.b32.cont [8/16] 0.0, 128
        %486 = vxpose.xlu0.b32.cont [9/16] 0.0, 128
        %487 = vxpose.xlu0.b32.cont [10/16] 0.0, 128
        %488 = vxpose.xlu0.b32.cont [11/16] 0.0, 128
        %489 = vxpose.xlu0.b32.cont [12/16] 0.0, 128
        %490 = vxpose.xlu0.b32.cont [13/16] 0.0, 128
        %491 = vxpose.xlu0.b32.cont [14/16] 0.0, 128
        %492 = vxpose.xlu0.b32.cont [15/16] 0.0, 128
        %493 = vxpose.xlu0.b32.end [16/16] 0.0, 128
        %v494 = vpop.trf.xlu0
        %v495 = vpop.trf.xlu0
        %v496 = vpop.trf.xlu0
        %v497 = vpop.trf.xlu0
        %v498 = vpop.trf.xlu0
        %v499 = vpop.trf.xlu0
        %v500 = vpop.trf.xlu0
        %v501 = vpop.trf.xlu0
        %v502 = vpop.trf.xlu0
        %v503 = vpop.trf.xlu0
        %v504 = vpop.trf.xlu0
        %v505 = vpop.trf.xlu0
        %v506 = vpop.trf.xlu0
        %v507 = vpop.trf.xlu0
        %v508 = vpop.trf.xlu0
        %v509 = vpop.trf.xlu0
        %v511 = vsel %vm380, %v494, 0
        %v514 = vsel %vm380, %v495, 0
        %v517 = vsel %vm380, %v496, 0
        %v520 = vsel %vm380, %v497, 0
        %522 = vmatprep.subr.mxu0 0.0
        %523 = vmatpush1.msra.mxu0 %v329
        %524 = vmatprep.subr.mxu0 0.0
        %525 = vmatpush1.msra.mxu0 0.0
        %526 = vmatprep.subr.mxu0 0.0
        %527 = vmatpush1.msra.mxu0 0.0
        %528 = vmatprep.subr.mxu0 0.0
        %529 = vmatpush1.msra.mxu0 0.0
        %530 = vmatprep.subr.mxu0 0.0
        %531 = vmatpush1.msra.mxu0 0.0
        %532 = vmatprep.subr.mxu0 0.0
        %533 = vmatpush1.msra.mxu0 0.0
        %534 = vmatprep.subr.mxu0 0.0
        %535 = vmatpush1.msra.mxu0 0.0
        %536 = vmatprep.subr.mxu0 0.0
        %537 = vmatpush1.msra.mxu0 0.0
        %538 = vmatprep.subr.mxu0 0.0
        %539 = vmatpush1.msra.mxu0 0.0
        %540 = vmatprep.subr.mxu0 0.0
        %541 = vmatpush1.msra.mxu0 0.0
        %542 = vmatprep.subr.mxu0 0.0
        %543 = vmatpush1.msra.mxu0 0.0
        %544 = vmatprep.subr.mxu0 0.0
        %545 = vmatpush1.msra.mxu0 0.0
        %546 = vmatprep.subr.mxu0 0.0
        %547 = vmatpush1.msra.mxu0 0.0
        %548 = vmatprep.subr.mxu0 0.0
        %549 = vmatpush1.msra.mxu0 0.0
        %550 = vmatprep.subr.mxu0 0.0
        %551 = vmatpush1.msra.mxu0 0.0
        %552 = vmatprep.subr.mxu0 0.0
        %553 = vmatpush1.msra.mxu0 0.0
        %554 = vmatprep.subr.mxu0 0.0
        %555 = vmatpush1.msra.mxu0 0.0
        %556 = vmatprep.subr.mxu0 0.0
        %557 = vmatpush1.msra.mxu0 0.0
        %558 = vmatprep.subr.mxu0 0.0
        %559 = vmatpush1.msra.mxu0 0.0
        %560 = vmatprep.subr.mxu0 0.0
        %561 = vmatpush1.msra.mxu0 0.0
        %562 = vmatprep.subr.mxu0 0.0
        %563 = vmatpush1.msra.mxu0 0.0
        %564 = vmatprep.subr.mxu0 0.0
        %565 = vmatpush1.msra.mxu0 0.0
        %566 = vmatprep.subr.mxu0 0.0
        %567 = vmatpush1.msra.mxu0 0.0
        %568 = vmatprep.subr.mxu0 0.0
        %569 = vmatpush1.msra.mxu0 0.0
        %570 = vmatprep.subr.mxu0 0.0
        %571 = vmatpush1.msra.mxu0 0.0
        %572 = vmatprep.subr.mxu0 0.0
        %573 = vmatpush1.msra.mxu0 0.0
        %574 = vmatprep.subr.mxu0 0.0
        %575 = vmatpush1.msra.mxu0 0.0
        %576 = vmatprep.subr.mxu0 0.0
        %577 = vmatpush1.msra.mxu0 0.0
        %578 = vmatprep.subr.mxu0 0.0
        %579 = vmatpush1.msra.mxu0 0.0
        %580 = vmatprep.subr.mxu0 0.0
        %581 = vmatpush1.msra.mxu0 0.0
        %582 = vmatprep.subr.mxu0 0.0
        %583 = vmatpush1.msra.mxu0 0.0
        %584 = vmatprep.subr.mxu0 0.0
        %585 = vmatpush1.msra.mxu0 0.0
        %586 = vmatprep.mubr.f32.mxu0 0.0
        %587 = vmatmul.mubr.f32.gmra.mrb[0].mxu0 %v511
        %v588 = vpop.f32.mrb[0].mxu0
        %v589 = vadd.f32 0.0, %v588
        %v590 = vpop.f32.mrb[0].mxu0
        %591 = vmatprep.mubr.f32.mxu0 0.0
        %592 = vmatmul.mubr.f32.gmra.mrb[0].mxu0 %v514
        %v593 = vpop.f32.mrb[0].mxu0
        %v594 = vadd.f32 0.0, %v593
        %v595 = vpop.f32.mrb[0].mxu0
        %596 = vmatprep.mubr.f32.mxu0 0.0
        %597 = vmatmul.mubr.f32.gmra.mrb[0].mxu0 %v517
        %v598 = vpop.f32.mrb[0].mxu0
        %v599 = vadd.f32 0.0, %v598
        %v600 = vpop.f32.mrb[0].mxu0
        %601 = vmatprep.mubr.f32.mxu0 0.0
        %602 = vmatmul.mubr.f32.gmra.mrb[0].mxu0 %v520
        %v603 = vpop.f32.mrb[0].mxu0
        %v604 = vadd.f32 0.0, %v603
        %v605 = vpop.f32.mrb[0].mxu0
        %606 = vdwg.mxu0
        %607 = vxpose.xlu0.b32.start [1/16] %v322, 128
        %608 = vxpose.xlu0.b32.cont [2/16] 0.0, 128
        %609 = vxpose.xlu0.b32.cont [3/16] 0.0, 128
        %610 = vxpose.xlu0.b32.cont [4/16] 0.0, 128
        %611 = vxpose.xlu0.b32.cont [5/16] 0.0, 128
        %612 = vxpose.xlu0.b32.cont [6/16] 0.0, 128
        %613 = vxpose.xlu0.b32.cont [7/16] 0.0, 128
        %614 = vxpose.xlu0.b32.cont [8/16] 0.0, 128
        %615 = vxpose.xlu0.b32.cont [9/16] 0.0, 128
        %616 = vxpose.xlu0.b32.cont [10/16] 0.0, 128
        %617 = vxpose.xlu0.b32.cont [11/16] 0.0, 128
        %618 = vxpose.xlu0.b32.cont [12/16] 0.0, 128
        %619 = vxpose.xlu0.b32.cont [13/16] 0.0, 128
        %620 = vxpose.xlu0.b32.cont [14/16] 0.0, 128
        %621 = vxpose.xlu0.b32.cont [15/16] 0.0, 128
        %622 = vxpose.xlu0.b32.end [16/16] 0.0, 128
        %v623 = vpop.trf.xlu0
        %v624 = vpop.trf.xlu0
        %v625 = vpop.trf.xlu0
        %v626 = vpop.trf.xlu0
        %v627 = vpop.trf.xlu0
        %v628 = vpop.trf.xlu0
        %v629 = vpop.trf.xlu0
        %v630 = vpop.trf.xlu0
        %v631 = vpop.trf.xlu0
        %v632 = vpop.trf.xlu0
        %v633 = vpop.trf.xlu0
        %v634 = vpop.trf.xlu0
        %v635 = vpop.trf.xlu0
        %v636 = vpop.trf.xlu0
        %v637 = vpop.trf.xlu0
        %v638 = vpop.trf.xlu0
        %v640 = vsel %vm380, %v623, 0
        %v643 = vsel %vm380, %v624, 0
        %v646 = vsel %vm380, %v625, 0
        %v649 = vsel %vm380, %v626, 0
        %651 = vmatprep.subr.mxu0 0.0
        %652 = vmatpush1.msra.mxu0 %v330
        %653 = vmatprep.subr.mxu0 0.0
        %654 = vmatpush1.msra.mxu0 0.0
        %655 = vmatprep.subr.mxu0 0.0
        %656 = vmatpush1.msra.mxu0 0.0
        %657 = vmatprep.subr.mxu0 0.0
        %658 = vmatpush1.msra.mxu0 0.0
        %659 = vmatprep.subr.mxu0 0.0
        %660 = vmatpush1.msra.mxu0 0.0
        %661 = vmatprep.subr.mxu0 0.0
        %662 = vmatpush1.msra.mxu0 0.0
        %663 = vmatprep.subr.mxu0 0.0
        %664 = vmatpush1.msra.mxu0 0.0
        %665 = vmatprep.subr.mxu0 0.0
        %666 = vmatpush1.msra.mxu0 0.0
        %667 = vmatprep.subr.mxu0 0.0
        %668 = vmatpush1.msra.mxu0 0.0
        %669 = vmatprep.subr.mxu0 0.0
        %670 = vmatpush1.msra.mxu0 0.0
        %671 = vmatprep.subr.mxu0 0.0
        %672 = vmatpush1.msra.mxu0 0.0
        %673 = vmatprep.subr.mxu0 0.0
        %674 = vmatpush1.msra.mxu0 0.0
        %675 = vmatprep.subr.mxu0 0.0
        %676 = vmatpush1.msra.mxu0 0.0
        %677 = vmatprep.subr.mxu0 0.0
        %678 = vmatpush1.msra.mxu0 0.0
        %679 = vmatprep.subr.mxu0 0.0
        %680 = vmatpush1.msra.mxu0 0.0
        %681 = vmatprep.subr.mxu0 0.0
        %682 = vmatpush1.msra.mxu0 0.0
        %683 = vmatprep.subr.mxu0 0.0
        %684 = vmatpush1.msra.mxu0 0.0
        %685 = vmatprep.subr.mxu0 0.0
        %686 = vmatpush1.msra.mxu0 0.0
        %687 = vmatprep.subr.mxu0 0.0
        %688 = vmatpush1.msra.mxu0 0.0
        %689 = vmatprep.subr.mxu0 0.0
        %690 = vmatpush1.msra.mxu0 0.0
        %691 = vmatprep.subr.mxu0 0.0
        %692 = vmatpush1.msra.mxu0 0.0
        %693 = vmatprep.subr.mxu0 0.0
        %694 = vmatpush1.msra.mxu0 0.0
        %695 = vmatprep.subr.mxu0 0.0
        %696 = vmatpush1.msra.mxu0 0.0
        %697 = vmatprep.subr.mxu0 0.0
        %698 = vmatpush1.msra.mxu0 0.0
        %699 = vmatprep.subr.mxu0 0.0
        %700 = vmatpush1.msra.mxu0 0.0
        %701 = vmatprep.subr.mxu0 0.0
        %702 = vmatpush1.msra.mxu0 0.0
        %703 = vmatprep.subr.mxu0 0.0
        %704 = vmatpush1.msra.mxu0 0.0
        %705 = vmatprep.subr.mxu0 0.0
        %706 = vmatpush1.msra.mxu0 0.0
        %707 = vmatprep.subr.mxu0 0.0
        %708 = vmatpush1.msra.mxu0 0.0
        %709 = vmatprep.subr.mxu0 0.0
        %710 = vmatpush1.msra.mxu0 0.0
        %711 = vmatprep.subr.mxu0 0.0
        %712 = vmatpush1.msra.mxu0 0.0
        %713 = vmatprep.subr.mxu0 0.0
        %714 = vmatpush1.msra.mxu0 0.0
        %715 = vmatprep.mubr.f32.mxu0 0.0
        %716 = vmatmul.mubr.f32.gmra.mrb[0].mxu0 %v640
        %v717 = vpop.f32.mrb[0].mxu0
        %v718 = vadd.f32 0.0, %v717
        %v719 = vpop.f32.mrb[0].mxu0
        %720 = vmatprep.mubr.f32.mxu0 0.0
        %721 = vmatmul.mubr.f32.gmra.mrb[0].mxu0 %v643
        %v722 = vpop.f32.mrb[0].mxu0
        %v723 = vadd.f32 0.0, %v722
        %v724 = vpop.f32.mrb[0].mxu0
        %725 = vmatprep.mubr.f32.mxu0 0.0
        %726 = vmatmul.mubr.f32.gmra.mrb[0].mxu0 %v646
        %v727 = vpop.f32.mrb[0].mxu0
        %v728 = vadd.f32 0.0, %v727
        %v729 = vpop.f32.mrb[0].mxu0
        %730 = vmatprep.mubr.f32.mxu0 0.0
        %731 = vmatmul.mubr.f32.gmra.mrb[0].mxu0 %v649
        %v732 = vpop.f32.mrb[0].mxu0
        %v733 = vadd.f32 0.0, %v732
        %v734 = vpop.f32.mrb[0].mxu0
        %735 = vdwg.mxu0
        %736 = vxpose.xlu0.b32.start [1/16] %v323, 128
        %737 = vxpose.xlu0.b32.cont [2/16] 0.0, 128
        %738 = vxpose.xlu0.b32.cont [3/16] 0.0, 128
        %739 = vxpose.xlu0.b32.cont [4/16] 0.0, 128
        %740 = vxpose.xlu0.b32.cont [5/16] 0.0, 128
        %741 = vxpose.xlu0.b32.cont [6/16] 0.0, 128
        %742 = vxpose.xlu0.b32.cont [7/16] 0.0, 128
        %743 = vxpose.xlu0.b32.cont [8/16] 0.0, 128
        %744 = vxpose.xlu0.b32.cont [9/16] 0.0, 128
        %745 = vxpose.xlu0.b32.cont [10/16] 0.0, 128
        %746 = vxpose.xlu0.b32.cont [11/16] 0.0, 128
        %747 = vxpose.xlu0.b32.cont [12/16] 0.0, 128
        %748 = vxpose.xlu0.b32.cont [13/16] 0.0, 128
        %749 = vxpose.xlu0.b32.cont [14/16] 0.0, 128
        %750 = vxpose.xlu0.b32.cont [15/16] 0.0, 128
        %751 = vxpose.xlu0.b32.end [16/16] 0.0, 128
        %v752 = vpop.trf.xlu0
        %v753 = vpop.trf.xlu0
        %v754 = vpop.trf.xlu0
        %v755 = vpop.trf.xlu0
        %v756 = vpop.trf.xlu0
        %v757 = vpop.trf.xlu0
        %v758 = vpop.trf.xlu0
        %v759 = vpop.trf.xlu0
        %v760 = vpop.trf.xlu0
        %v761 = vpop.trf.xlu0
        %v762 = vpop.trf.xlu0
        %v763 = vpop.trf.xlu0
        %v764 = vpop.trf.xlu0
        %v765 = vpop.trf.xlu0
        %v766 = vpop.trf.xlu0
        %v767 = vpop.trf.xlu0
        %v769 = vsel %vm380, %v752, 0
        %v772 = vsel %vm380, %v753, 0
        %v775 = vsel %vm380, %v754, 0
        %v778 = vsel %vm380, %v755, 0
        %780 = vmatprep.subr.mxu0 0.0
        %781 = vmatpush1.msra.mxu0 %v331
        %782 = vmatprep.subr.mxu0 0.0
        %783 = vmatpush1.msra.mxu0 0.0
        %784 = vmatprep.subr.mxu0 0.0
        %785 = vmatpush1.msra.mxu0 0.0
        %786 = vmatprep.subr.mxu0 0.0
        %787 = vmatpush1.msra.mxu0 0.0
        %788 = vmatprep.subr.mxu0 0.0
        %789 = vmatpush1.msra.mxu0 0.0
        %790 = vmatprep.subr.mxu0 0.0
        %791 = vmatpush1.msra.mxu0 0.0
        %792 = vmatprep.subr.mxu0 0.0
        %793 = vmatpush1.msra.mxu0 0.0
        %794 = vmatprep.subr.mxu0 0.0
        %795 = vmatpush1.msra.mxu0 0.0
        %796 = vmatprep.subr.mxu0 0.0
        %797 = vmatpush1.msra.mxu0 0.0
        %798 = vmatprep.subr.mxu0 0.0
        %799 = vmatpush1.msra.mxu0 0.0
        %800 = vmatprep.subr.mxu0 0.0
        %801 = vmatpush1.msra.mxu0 0.0
        %802 = vmatprep.subr.mxu0 0.0
        %803 = vmatpush1.msra.mxu0 0.0
        %804 = vmatprep.subr.mxu0 0.0
        %805 = vmatpush1.msra.mxu0 0.0
        %806 = vmatprep.subr.mxu0 0.0
        %807 = vmatpush1.msra.mxu0 0.0
        %808 = vmatprep.subr.mxu0 0.0
        %809 = vmatpush1.msra.mxu0 0.0
        %810 = vmatprep.subr.mxu0 0.0
        %811 = vmatpush1.msra.mxu0 0.0
        %812 = vmatprep.subr.mxu0 0.0
        %813 = vmatpush1.msra.mxu0 0.0
        %814 = vmatprep.subr.mxu0 0.0
        %815 = vmatpush1.msra.mxu0 0.0
        %816 = vmatprep.subr.mxu0 0.0
        %817 = vmatpush1.msra.mxu0 0.0
        %818 = vmatprep.subr.mxu0 0.0
        %819 = vmatpush1.msra.mxu0 0.0
        %820 = vmatprep.subr.mxu0 0.0
        %821 = vmatpush1.msra.mxu0 0.0
        %822 = vmatprep.subr.mxu0 0.0
        %823 = vmatpush1.msra.mxu0 0.0
        %824 = vmatprep.subr.mxu0 0.0
        %825 = vmatpush1.msra.mxu0 0.0
        %826 = vmatprep.subr.mxu0 0.0
        %827 = vmatpush1.msra.mxu0 0.0
        %828 = vmatprep.subr.mxu0 0.0
        %829 = vmatpush1.msra.mxu0 0.0
        %830 = vmatprep.subr.mxu0 0.0
        %831 = vmatpush1.msra.mxu0 0.0
        %832 = vmatprep.subr.mxu0 0.0
        %833 = vmatpush1.msra.mxu0 0.0
        %834 = vmatprep.subr.mxu0 0.0
        %835 = vmatpush1.msra.mxu0 0.0
        %836 = vmatprep.subr.mxu0 0.0
        %837 = vmatpush1.msra.mxu0 0.0
        %838 = vmatprep.subr.mxu0 0.0
        %839 = vmatpush1.msra.mxu0 0.0
        %840 = vmatprep.subr.mxu0 0.0
        %841 = vmatpush1.msra.mxu0 0.0
        %842 = vmatprep.subr.mxu0 0.0
        %843 = vmatpush1.msra.mxu0 0.0
        %844 = vmatprep.mubr.f32.mxu0 0.0
        %845 = vmatmul.mubr.f32.gmra.mrb[0].mxu0 %v769
        %v846 = vpop.f32.mrb[0].mxu0
        %v847 = vadd.f32 0.0, %v846
        %v848 = vpop.f32.mrb[0].mxu0
        %849 = vmatprep.mubr.f32.mxu0 0.0
        %850 = vmatmul.mubr.f32.gmra.mrb[0].mxu0 %v772
        %v851 = vpop.f32.mrb[0].mxu0
        %v852 = vadd.f32 0.0, %v851
        %v853 = vpop.f32.mrb[0].mxu0
        %854 = vmatprep.mubr.f32.mxu0 0.0
        %855 = vmatmul.mubr.f32.gmra.mrb[0].mxu0 %v775
        %v856 = vpop.f32.mrb[0].mxu0
        %v857 = vadd.f32 0.0, %v856
        %v858 = vpop.f32.mrb[0].mxu0
        %859 = vmatprep.mubr.f32.mxu0 0.0
        %860 = vmatmul.mubr.f32.gmra.mrb[0].mxu0 %v778
        %v861 = vpop.f32.mrb[0].mxu0
        %v862 = vadd.f32 0.0, %v861
        %v863 = vpop.f32.mrb[0].mxu0
        %864 = vdwg.mxu0
        %v865 = vadd.f32 %v332, %v460
        %v866 = vadd.f32 %v333, %v465
        %v867 = vadd.f32 %v334, %v470
        %v868 = vadd.f32 %v335, %v475
        %v869 = vadd.f32 %v336, %v589
        %v870 = vadd.f32 %v337, %v594
        %v871 = vadd.f32 %v338, %v599
        %v872 = vadd.f32 %v339, %v604
        %v873 = vadd.f32 %v340, %v718
        %v874 = vadd.f32 %v341, %v723
        %v875 = vadd.f32 %v342, %v728
        %v876 = vadd.f32 %v343, %v733
        %v877 = vadd.f32 %v344, %v847
        %v878 = vadd.f32 %v345, %v852
        %v879 = vadd.f32 %v346, %v857
        %v880 = vadd.f32 %v347, %v862
        %vm881 = vcmask 261120
        %882 = vst.msk [vmem:[%s255] sm:$0xff] %vm881, %v865
        %883 = vst.msk [vmem:[%s255 + $0x8] sm:$0xff] %vm881, %v866
        %884 = vst.msk [vmem:[%s255 + $0x10] sm:$0xff] %vm881, %v867
        %885 = vst.msk [vmem:[%s255 + $0x18] sm:$0xff] %vm881, %v868
        %886 = vst.msk [vmem:[%s255 + $0x20] sm:$0xff] %vm881, %v869
        %887 = vst.msk [vmem:[%s255 + $0x28] sm:$0xff] %vm881, %v870
        %888 = vst.msk [vmem:[%s255 + $0x30] sm:$0xff] %vm881, %v871
        %889 = vst.msk [vmem:[%s255 + $0x38] sm:$0xff] %vm881, %v872
        %890 = vst.msk [vmem:[%s255 + $0x40] sm:$0xff] %vm881, %v873
        %891 = vst.msk [vmem:[%s255 + $0x48] sm:$0xff] %vm881, %v874
        %892 = vst.msk [vmem:[%s255 + $0x50] sm:$0xff] %vm881, %v875
        %893 = vst.msk [vmem:[%s255 + $0x58] sm:$0xff] %vm881, %v876
        %894 = vst.msk [vmem:[%s255 + $0x60] sm:$0xff] %vm881, %v877
        %895 = vst.msk [vmem:[%s255 + $0x68] sm:$0xff] %vm881, %v878
        %896 = vst.msk [vmem:[%s255 + $0x70] sm:$0xff] %vm881, %v879
        %897 = vst.msk [vmem:[%s255 + $0x78] sm:$0xff] %vm881, %v880
        %v898 = vld [vmem:[%s262] sm:$0xf]
        %v899 = vsel %vm881, %v320, 0.0
        %v900 = vrot.slane %v899, 4
        %v901 = vadd.f32 %v899, %v900
        %v902 = vrot.slane %v901, 2
        %v903 = vadd.f32 %v901, %v902
        %v904 = vrot.slane %v903, 1
        %v905 = vadd.f32 %v903, %v904
        %v906 = vsel %vm881, %v321, 0.0
        %v907 = vrot.slane %v906, 4
        %v908 = vadd.f32 %v906, %v907
        %v909 = vrot.slane %v908, 2
        %v910 = vadd.f32 %v908, %v909
        %v911 = vrot.slane %v910, 1
        %v912 = vadd.f32 %v910, %v911
        %v913 = vsel %vm881, %v322, 0.0
        %v914 = vrot.slane %v913, 4
        %v915 = vadd.f32 %v913, %v914
        %v916 = vrot.slane %v915, 2
        %v917 = vadd.f32 %v915, %v916
        %v918 = vrot.slane %v917, 1
        %v919 = vadd.f32 %v917, %v918
        %v920 = vsel %vm881, %v323, 0.0
        %v921 = vrot.slane %v920, 4
        %v922 = vadd.f32 %v920, %v921
        %v923 = vrot.slane %v922, 2
        %v924 = vadd.f32 %v922, %v923
        %v925 = vrot.slane %v924, 1
        %v926 = vadd.f32 %v924, %v925
        %vm931 = vcmask 1041409
        %v932 = vsel %vm931, %v912, %v905
        %vm933 = vcmask 1042434
        %v934 = vsel %vm933, %v919, %v932
        %vm935 = vcmask 1043459
        %v936 = vsel %vm935, %v926, %v934
        %v938 = vadd.f32 %v898, %v936
        %vm939 = vcmask 257024
        %940 = vst.msk [vmem:[%s262] sm:$0xf] %vm939, %v938
        %s941 = sand.u32 %s108, 1
        %s942 = scalar_lea.sflag [#allocation6], %s941
        %s943 = sand.u32 %s108, 1
        %s944 = smul.addr %s943, 128
        %s945 = scalar_lea.vmem [#allocation9], %s944
        %s946 = sand.u32 %s134, 1
        %s947 = scalar_lea.sflag [#allocation11], %s946
        %s948 = sand.u32 %s134, 1
        %s949 = smul.addr %s948, 4
        %s950 = scalar_lea.vmem [#allocation10], %s949
        // Predicated region
        $region41: #{tpu_custom_call.1} parent=27 // pred_check
          %p951 = pneg %p118
        $region42: #{tpu_custom_call.1} parent=27 // pred_check_branch
          %953 = sbr.rel (%p951) target = $region44
        $region43: #{tpu_custom_call.1} parent=27 // pred_region
          %s955 = ssub.s32 2048, 2048
          %956 = vsyncadd %s942, %s955
          %s957 = smul.addr %s36, 16
          %s958 = smul.addr %s957, 128
          %s959 = scalar_lea.hbm %s3, %s958
          %s960 = sshll.u32 %s945, 4
          %s961 = int_to_ptr.vmem [resolvable:$true] %s960
          %966 = dma.vmem_to_hbm [thread:$0]  %s961, 2048, %s959, %s942, 128, 128, 8
        $region44: #{tpu_custom_call.1} parent=27 // pred_fallthru
          _
        // Predicated region
        $region45: #{tpu_custom_call.1} parent=27 // pred_check
          %p967 = pneg %p144
        $region46: #{tpu_custom_call.1} parent=27 // pred_check_branch
          %969 = sbr.rel (%p967) target = $region48
        $region47: #{tpu_custom_call.1} parent=27 // pred_region
          %s971 = ssub.s32 64, 64
          %972 = vsyncadd %s947, %s971
          %s973 = smul.addr %s36, 64
          %s974 = scalar_lea.hbm %s4, %s973
          %s976 = sshll.u32 %s950, 4
          %s977 = int_to_ptr.vmem [resolvable:$true] %s976
          %979 = dma.vmem_to_hbm [thread:$0]  %s977, 64, %s974, %s947
        $region48: #{tpu_custom_call.1} parent=27 // pred_fallthru
          _
      $region28: #{tpu_custom_call.1} parent=5 // pred_fallthru
        _
      %p980 = scmp.le.s32.totalorder 2, %s27
      // Predicated region
      $region49: #{tpu_custom_call.1} parent=5 // pred_check
        %p981 = pneg %p980
      $region50: #{tpu_custom_call.1} parent=5 // pred_check_branch
        %983 = sbr.rel (%p981) target = $region52
      $region51: #{tpu_custom_call.1} parent=5 // pred_region
        %s984 = ssub.s32 %s27, 2
        // Predicated region
        $region53: #{tpu_custom_call.1} parent=51 // pred_check
          %p985 = pneg %p124
        $region54: #{tpu_custom_call.1} parent=51 // pred_check_branch
          %987 = sbr.rel (%p985) target = $region56
        $region55: #{tpu_custom_call.1} parent=51 // pred_region
          %s988 = sand.u32 %s109, 1
          %s989 = scalar_lea.sflag [#allocation6], %s988
          %s990 = sand.u32 %s109, 1
          %s991 = smul.addr %s990, 128
          %s992 = scalar_lea.vmem [#allocation9], %s991
          %993 = dma.done %s989, 2048
        $region56: #{tpu_custom_call.1} parent=51 // pred_fallthru
          _
        // Predicated region
        $region57: #{tpu_custom_call.1} parent=51 // pred_check
          %p994 = pneg %p150
        $region58: #{tpu_custom_call.1} parent=51 // pred_check_branch
          %996 = sbr.rel (%p994) target = $region60
        $region59: #{tpu_custom_call.1} parent=51 // pred_region
          %s997 = sand.u32 %s135, 1
          %s998 = scalar_lea.sflag [#allocation11], %s997
          %s999 = sand.u32 %s135, 1
          %s1000 = smul.addr %s999, 4
          %s1001 = scalar_lea.vmem [#allocation10], %s1000
          %1002 = dma.done %s998, 64
        $region60: #{tpu_custom_call.1} parent=51 // pred_fallthru
          _
      $region52: #{tpu_custom_call.1} parent=5 // pred_fallthru
        _
    $region6: #{tpu_custom_call.1} parent=1 // loop_footer
      %s31 = sadd.s32 1, %s27
    $region7: #{tpu_custom_call.1} parent=1 // loop_footer_branch
      %26 = sbr.rel target = $region3
    $region8: #{tpu_custom_call.1} parent=1 // loop_exit
      _
    %1003 = vsyncpa [#allocation5], 1
    %s1004 = scalar_lea.sflag [#allocation5], 1
    %1005 = vsyncpa %s1004, 1
    %1006 = vsyncpa [#allocation8], 1
    %s1007 = scalar_lea.sflag [#allocation8], 1
    %1008 = vsyncpa %s1007, 1
    %1009 = vsyncpa [#allocation6], 1
    %s1010 = scalar_lea.sflag [#allocation6], 1
    %1011 = vsyncpa %s1010, 1
    %1012 = vsyncpa [#allocation11], 1
    %s1013 = scalar_lea.sflag [#allocation11], 1
    %1014 = vsyncpa %s1013, 1

</llo_original>
